<compile_context>
chip_gen: v5e
topology: v5e:2x2
jax: 0.10.0
libtpu: 0.0.40
codegen_flags: <defaults>
</compile_context>

<pallas_src>
import functools

import jax
import jax.numpy as jnp
from jax import lax
from jax.experimental import pallas as pl
from jax.experimental.pallas import tpu as pltpu


def rnn_fc_kernel(ids_ref, wcomb_ref, whh_ref, wfc_ref, bfc_ref, out_ref, *, T):
    """Fused embedding + tanh-RNN recurrence + final Linear.

    ids_ref  : (Bp, T)   int32 token ids (padded batch rows use token 0)
    wcomb_ref: (Vp, H)   bf16, emb_table @ W_ih + (b_ih + b_hh), vocab padded to 128
    whh_ref  : (H, H)    bf16, W_hh^T (right-multiply layout)
    wfc_ref  : (H, Cp)   f32,  W_fc^T padded to Cp=128 columns
    bfc_ref  : (1, Cp)   f32
    out_ref  : (Bp, Cp)  f32 logits (pad rows / pad columns are garbage, sliced outside)
    """
    Bp = ids_ref.shape[0]
    Vp = wcomb_ref.shape[0]

    ids = ids_ref[...]                                   # (Bp, T) int32
    wcomb = wcomb_ref[...]                               # (Vp, H) bf16
    whh = whh_ref[...]                                   # (H, H)  bf16

    iota_v = lax.broadcasted_iota(jnp.int32, (Bp, Vp), 1)

    # Fused embedding gather + input projection + bias:
    #   one_hot(ids_t) @ w_comb == emb[ids_t] @ W_ih + (b_ih + b_hh)
    # These T matmuls do not depend on h -> they sit off the serial recurrence chain.
    xw = []
    for t in range(T):
        onehot_t = (iota_v == ids[:, t:t + 1]).astype(jnp.bfloat16)            # (Bp, Vp)
        xw.append(jnp.dot(onehot_t, wcomb, preferred_element_type=jnp.float32))  # (Bp, H)

    # Vanilla tanh RNN, h0 = 0 (PyTorch default) => h1 = tanh(x0).
    # h carried in vregs (f32); recurrent matmul inputs bf16, accumulation f32.
    h = jnp.tanh(xw[0])
    for t in range(1, T):
        h = jnp.tanh(xw[t] + jnp.dot(h.astype(jnp.bfloat16), whh,
                                     preferred_element_type=jnp.float32))
    # TODO(synk): at large T switch the two loops above to lax.fori_loop(unroll=k)
    #             over a VMEM xw slab to bound vreg live ranges.

    # nn.Dropout(p=0.5) is identity in eval mode.
    # Final Linear; b_fc kept as a tiny separate input (fold into the matmul is minor).
    out_ref[...] = (jnp.dot(h, wfc_ref[...], preferred_element_type=jnp.float32)
                    + bfc_ref[...])


def prepare_params(params):
    """One-time (per-model) parameter preparation, hoisted out of the forward path."""
    emb = params["embedding"]          # (V, E), row 0 zeros (padding_idx=0)
    w_ih = params["w_ih"]              # (E, H)   == W_ih^T
    w_hh = params["w_hh"]              # (H, H)   == W_hh^T
    b = params["b"]                    # (1, H)   == b_ih + b_hh
    w_fc = params["w_fc"]              # (H, C)   == W_fc^T
    b_fc = params["b_fc"]              # (1, C)

    V, _ = emb.shape
    C = w_fc.shape[1]
    Vp = ((V + 127) // 128) * 128      # lane-dense one-hot / table rows
    Cp = 128                           # lane-dense output store

    # Embedding lookup is linear => fold projection + bias into one (V, H) table:
    #   emb[tok] @ W_ih + b == (emb @ W_ih + b)[tok]
    w_comb = jnp.dot(emb, w_ih, precision=lax.Precision.HIGHEST,
                     preferred_element_type=jnp.float32) + b
    w_comb = jnp.pad(w_comb, ((0, Vp - V), (0, 0))).astype(jnp.bfloat16)

    return {
        "w_comb": w_comb,                                   # (Vp, H) bf16
        "w_hh": w_hh.astype(jnp.bfloat16),                  # (H, H)  bf16
        "w_fc": jnp.pad(w_fc, ((0, 0), (0, Cp - C))),       # (H, Cp) f32
        "b_fc": jnp.pad(b_fc, ((0, 0), (0, Cp - C))),       # (1, Cp) f32
    }


def simple_rnn_forward(text_tensor, prep, *, n_classes=2):
    """JAX/Pallas equivalent of SimpleRNN.forward (eval mode).

    text_tensor: int token ids, shape (B, T)   (batch_first, like PyTorch)
    prep       : output of prepare_params (precomputed, padded, bf16 tables)
    """
    w_comb, w_hh, w_fc, b_fc = prep["w_comb"], prep["w_hh"], prep["w_fc"], prep["b_fc"]
    B, T = text_tensor.shape
    Cp = w_fc.shape[1]

    # Pad batch to a multiple of 8 (f32 sublane); pad rows use token 0 and their
    # outputs are discarded below (do not reduce over `out` before the slice).
    Bp = ((B + 7) // 8) * 8
    ids = text_tensor.astype(jnp.int32)
    if Bp != B:
        ids = jnp.pad(ids, ((0, Bp - B), (0, 0)))

    vmem = pl.BlockSpec(memory_space=pltpu.MemorySpace.VMEM)
    out = pl.pallas_call(
        functools.partial(rnn_fc_kernel, T=T),
        out_shape=jax.ShapeDtypeStruct((Bp, Cp), jnp.float32),
        in_specs=[vmem] * 5,
        out_specs=vmem,
    )(ids, w_comb, w_hh, w_fc, b_fc)
    return out[:B, :n_classes]


def simple_rnn_reference(text_tensor, params):
    """Pure-JAX f32 reference (mirrors the PyTorch forward), for a sanity check."""
    hp = lax.Precision.HIGHEST
    emb = jnp.take(params["embedding"], text_tensor, axis=0)        # (B, T, E)
    B, T, _ = emb.shape
    H = params["w_hh"].shape[0]
    h = jnp.zeros((B, H), jnp.float32)
    for t in range(T):
        pre = (jnp.dot(emb[:, t, :], params["w_ih"], precision=hp)
               + jnp.dot(h, params["w_hh"], precision=hp)
               + params["b"])
        h = jnp.tanh(pre)
    return jnp.dot(h, params["w_fc"], precision=hp) + params["b_fc"]


def init_params(key, vocab_size, embedding_dim, hidden_size):
    k1, k2, k3, k4, k5, k6, k7 = jax.random.split(key, 7)
    bound = 1.0 / jnp.sqrt(hidden_size)

    emb = 0.1 * jax.random.normal(k1, (vocab_size, embedding_dim), jnp.float32)
    emb = emb.at[0].set(0.0)                                        # padding_idx=0

    w_ih = jax.random.uniform(k2, (embedding_dim, hidden_size),
                              jnp.float32, -bound, bound)
    w_hh = jax.random.uniform(k3, (hidden_size, hidden_size),
                              jnp.float32, -bound, bound)
    b_ih = jax.random.uniform(k4, (1, hidden_size), jnp.float32, -bound, bound)
    b_hh = jax.random.uniform(k5, (1, hidden_size), jnp.float32, -bound, bound)

    fc_bound = 1.0 / jnp.sqrt(hidden_size)
    w_fc = jax.random.uniform(k6, (hidden_size, 2), jnp.float32, -fc_bound, fc_bound)
    b_fc = jax.random.uniform(k7, (1, 2), jnp.float32, -fc_bound, fc_bound)

    return {"embedding": emb, "w_ih": w_ih, "w_hh": w_hh,
            "b": b_ih + b_hh, "w_fc": w_fc, "b_fc": b_fc}


if __name__ == "__main__":
    vocab_size, embedding_dim, hidden_size = 50, 16, 32
    batch, seq = 8, 8                       # batch chosen as a multiple of 8 (sublanes)

    key = jax.random.PRNGKey(0)
    pkey, tkey = jax.random.split(key)
    params = init_params(pkey, vocab_size, embedding_dim, hidden_size)
    prep = prepare_params(params)           # hoisted out of the per-call forward path

    # Deterministic token ids, include some padding (0) tokens implicitly.
    text = jax.random.randint(tkey, (batch, seq), 0, vocab_size, dtype=jnp.int32)

    fwd = jax.jit(functools.partial(simple_rnn_forward, n_classes=2))
    pred = fwd(text, prep)
    jax.block_until_ready(pred)
    assert pred.shape == (batch, 2)

    # bf16 weight path vs. f32 HIGHEST reference: slightly looser tolerance accepted.
    ref = simple_rnn_reference(text, params)
    assert jnp.allclose(pred, ref, atol=3e-2, rtol=3e-2), "mismatch vs reference"

    print("KERNEL_OK")
</pallas_src>

<mosaic_0001>
module attributes {stable_mosaic.version = 11 : i64} {
  func.func @rnn_fc_kernel(%arg0: memref<8x8xi32, #tpu.memory_space<vmem>>, %arg1: memref<128x32xbf16, #tpu.memory_space<vmem>>, %arg2: memref<32x32xbf16, #tpu.memory_space<vmem>>, %arg3: memref<32x128xf32, #tpu.memory_space<vmem>>, %arg4: memref<1x128xf32, #tpu.memory_space<vmem>>, %arg5: memref<8x128xf32, #tpu.memory_space<vmem>>) attributes {dimension_semantics = [], scalar_prefetch = 0 : i64, scratch_operands = 0 : i64, tpu.core_type = #tpu.core_type<tc>} {
    %c0 = arith.constant 0 : index
    %c0_0 = arith.constant 0 : index
    %0 = vector.load %arg0[%c0, %c0_0] : memref<8x8xi32, #tpu.memory_space<vmem>>, vector<8x8xi32>
    %c0_1 = arith.constant 0 : index
    %c0_2 = arith.constant 0 : index
    %1 = vector.load %arg1[%c0_1, %c0_2] : memref<128x32xbf16, #tpu.memory_space<vmem>>, vector<128x32xbf16>
    %c0_3 = arith.constant 0 : index
    %c0_4 = arith.constant 0 : index
    %2 = vector.load %arg2[%c0_3, %c0_4] : memref<32x32xbf16, #tpu.memory_space<vmem>>, vector<32x32xbf16>
    %3 = tpu.iota {dimensions = array<i32: 1>} : vector<8x128xi32>
    %4 = vector.extract_strided_slice %0 {offsets = [0, 0], sizes = [8, 1], strides = [1, 1]} : vector<8x8xi32> to vector<8x1xi32>
    %5 = vector.broadcast %4 : vector<8x1xi32> to vector<8x128xi32>
    %6 = arith.cmpi eq, %3, %5 : vector<8x128xi32>
    %7 = arith.extui %6 : vector<8x128xi1> to vector<8x128xi32>
    %8 = arith.sitofp %7 : vector<8x128xi32> to vector<8x128xf32>
    %9 = arith.truncf %8 : vector<8x128xf32> to vector<8x128xbf16>
    %cst = arith.constant dense<0.000000e+00> : vector<8x32xf32>
    %10 = tpu.matmul %9, %1, %cst {dimension_numbers = #tpu.dot_dimension_numbers<[1], [0], [0], [1], [0, 0, 1, 1], [], []>} : vector<8x128xbf16>, vector<128x32xbf16>, vector<8x32xf32> -> vector<8x32xf32>
    %11 = vector.extract_strided_slice %0 {offsets = [0, 1], sizes = [8, 1], strides = [1, 1]} : vector<8x8xi32> to vector<8x1xi32>
    %12 = vector.broadcast %11 : vector<8x1xi32> to vector<8x128xi32>
    %13 = arith.cmpi eq, %3, %12 : vector<8x128xi32>
    %14 = arith.extui %13 : vector<8x128xi1> to vector<8x128xi32>
    %15 = arith.sitofp %14 : vector<8x128xi32> to vector<8x128xf32>
    %16 = arith.truncf %15 : vector<8x128xf32> to vector<8x128xbf16>
    %cst_5 = arith.constant dense<0.000000e+00> : vector<8x32xf32>
    %17 = tpu.matmul %16, %1, %cst_5 {dimension_numbers = #tpu.dot_dimension_numbers<[1], [0], [0], [1], [0, 0, 1, 1], [], []>} : vector<8x128xbf16>, vector<128x32xbf16>, vector<8x32xf32> -> vector<8x32xf32>
    %18 = vector.extract_strided_slice %0 {offsets = [0, 2], sizes = [8, 1], strides = [1, 1]} : vector<8x8xi32> to vector<8x1xi32>
    %19 = vector.broadcast %18 : vector<8x1xi32> to vector<8x128xi32>
    %20 = arith.cmpi eq, %3, %19 : vector<8x128xi32>
    %21 = arith.extui %20 : vector<8x128xi1> to vector<8x128xi32>
    %22 = arith.sitofp %21 : vector<8x128xi32> to vector<8x128xf32>
    %23 = arith.truncf %22 : vector<8x128xf32> to vector<8x128xbf16>
    %cst_6 = arith.constant dense<0.000000e+00> : vector<8x32xf32>
    %24 = tpu.matmul %23, %1, %cst_6 {dimension_numbers = #tpu.dot_dimension_numbers<[1], [0], [0], [1], [0, 0, 1, 1], [], []>} : vector<8x128xbf16>, vector<128x32xbf16>, vector<8x32xf32> -> vector<8x32xf32>
    %25 = vector.extract_strided_slice %0 {offsets = [0, 3], sizes = [8, 1], strides = [1, 1]} : vector<8x8xi32> to vector<8x1xi32>
    %26 = vector.broadcast %25 : vector<8x1xi32> to vector<8x128xi32>
    %27 = arith.cmpi eq, %3, %26 : vector<8x128xi32>
    %28 = arith.extui %27 : vector<8x128xi1> to vector<8x128xi32>
    %29 = arith.sitofp %28 : vector<8x128xi32> to vector<8x128xf32>
    %30 = arith.truncf %29 : vector<8x128xf32> to vector<8x128xbf16>
    %cst_7 = arith.constant dense<0.000000e+00> : vector<8x32xf32>
    %31 = tpu.matmul %30, %1, %cst_7 {dimension_numbers = #tpu.dot_dimension_numbers<[1], [0], [0], [1], [0, 0, 1, 1], [], []>} : vector<8x128xbf16>, vector<128x32xbf16>, vector<8x32xf32> -> vector<8x32xf32>
    %32 = vector.extract_strided_slice %0 {offsets = [0, 4], sizes = [8, 1], strides = [1, 1]} : vector<8x8xi32> to vector<8x1xi32>
    %33 = vector.broadcast %32 : vector<8x1xi32> to vector<8x128xi32>
    %34 = arith.cmpi eq, %3, %33 : vector<8x128xi32>
    %35 = arith.extui %34 : vector<8x128xi1> to vector<8x128xi32>
    %36 = arith.sitofp %35 : vector<8x128xi32> to vector<8x128xf32>
    %37 = arith.truncf %36 : vector<8x128xf32> to vector<8x128xbf16>
    %cst_8 = arith.constant dense<0.000000e+00> : vector<8x32xf32>
    %38 = tpu.matmul %37, %1, %cst_8 {dimension_numbers = #tpu.dot_dimension_numbers<[1], [0], [0], [1], [0, 0, 1, 1], [], []>} : vector<8x128xbf16>, vector<128x32xbf16>, vector<8x32xf32> -> vector<8x32xf32>
    %39 = vector.extract_strided_slice %0 {offsets = [0, 5], sizes = [8, 1], strides = [1, 1]} : vector<8x8xi32> to vector<8x1xi32>
    %40 = vector.broadcast %39 : vector<8x1xi32> to vector<8x128xi32>
    %41 = arith.cmpi eq, %3, %40 : vector<8x128xi32>
    %42 = arith.extui %41 : vector<8x128xi1> to vector<8x128xi32>
    %43 = arith.sitofp %42 : vector<8x128xi32> to vector<8x128xf32>
    %44 = arith.truncf %43 : vector<8x128xf32> to vector<8x128xbf16>
    %cst_9 = arith.constant dense<0.000000e+00> : vector<8x32xf32>
    %45 = tpu.matmul %44, %1, %cst_9 {dimension_numbers = #tpu.dot_dimension_numbers<[1], [0], [0], [1], [0, 0, 1, 1], [], []>} : vector<8x128xbf16>, vector<128x32xbf16>, vector<8x32xf32> -> vector<8x32xf32>
    %46 = vector.extract_strided_slice %0 {offsets = [0, 6], sizes = [8, 1], strides = [1, 1]} : vector<8x8xi32> to vector<8x1xi32>
    %47 = vector.broadcast %46 : vector<8x1xi32> to vector<8x128xi32>
    %48 = arith.cmpi eq, %3, %47 : vector<8x128xi32>
    %49 = arith.extui %48 : vector<8x128xi1> to vector<8x128xi32>
    %50 = arith.sitofp %49 : vector<8x128xi32> to vector<8x128xf32>
    %51 = arith.truncf %50 : vector<8x128xf32> to vector<8x128xbf16>
    %cst_10 = arith.constant dense<0.000000e+00> : vector<8x32xf32>
    %52 = tpu.matmul %51, %1, %cst_10 {dimension_numbers = #tpu.dot_dimension_numbers<[1], [0], [0], [1], [0, 0, 1, 1], [], []>} : vector<8x128xbf16>, vector<128x32xbf16>, vector<8x32xf32> -> vector<8x32xf32>
    %53 = vector.extract_strided_slice %0 {offsets = [0, 7], sizes = [8, 1], strides = [1, 1]} : vector<8x8xi32> to vector<8x1xi32>
    %54 = vector.broadcast %53 : vector<8x1xi32> to vector<8x128xi32>
    %55 = arith.cmpi eq, %3, %54 : vector<8x128xi32>
    %56 = arith.extui %55 : vector<8x128xi1> to vector<8x128xi32>
    %57 = arith.sitofp %56 : vector<8x128xi32> to vector<8x128xf32>
    %58 = arith.truncf %57 : vector<8x128xf32> to vector<8x128xbf16>
    %cst_11 = arith.constant dense<0.000000e+00> : vector<8x32xf32>
    %59 = tpu.matmul %58, %1, %cst_11 {dimension_numbers = #tpu.dot_dimension_numbers<[1], [0], [0], [1], [0, 0, 1, 1], [], []>} : vector<8x128xbf16>, vector<128x32xbf16>, vector<8x32xf32> -> vector<8x32xf32>
    %60 = math.tanh %10 : vector<8x32xf32>
    %61 = arith.truncf %60 : vector<8x32xf32> to vector<8x32xbf16>
    %cst_12 = arith.constant dense<0.000000e+00> : vector<8x32xf32>
    %62 = tpu.matmul %61, %2, %cst_12 {dimension_numbers = #tpu.dot_dimension_numbers<[1], [0], [0], [1], [0, 0, 1, 1], [], []>} : vector<8x32xbf16>, vector<32x32xbf16>, vector<8x32xf32> -> vector<8x32xf32>
    %63 = arith.addf %17, %62 : vector<8x32xf32>
    %64 = math.tanh %63 : vector<8x32xf32>
    %65 = arith.truncf %64 : vector<8x32xf32> to vector<8x32xbf16>
    %cst_13 = arith.constant dense<0.000000e+00> : vector<8x32xf32>
    %66 = tpu.matmul %65, %2, %cst_13 {dimension_numbers = #tpu.dot_dimension_numbers<[1], [0], [0], [1], [0, 0, 1, 1], [], []>} : vector<8x32xbf16>, vector<32x32xbf16>, vector<8x32xf32> -> vector<8x32xf32>
    %67 = arith.addf %24, %66 : vector<8x32xf32>
    %68 = math.tanh %67 : vector<8x32xf32>
    %69 = arith.truncf %68 : vector<8x32xf32> to vector<8x32xbf16>
    %cst_14 = arith.constant dense<0.000000e+00> : vector<8x32xf32>
    %70 = tpu.matmul %69, %2, %cst_14 {dimension_numbers = #tpu.dot_dimension_numbers<[1], [0], [0], [1], [0, 0, 1, 1], [], []>} : vector<8x32xbf16>, vector<32x32xbf16>, vector<8x32xf32> -> vector<8x32xf32>
    %71 = arith.addf %31, %70 : vector<8x32xf32>
    %72 = math.tanh %71 : vector<8x32xf32>
    %73 = arith.truncf %72 : vector<8x32xf32> to vector<8x32xbf16>
    %cst_15 = arith.constant dense<0.000000e+00> : vector<8x32xf32>
    %74 = tpu.matmul %73, %2, %cst_15 {dimension_numbers = #tpu.dot_dimension_numbers<[1], [0], [0], [1], [0, 0, 1, 1], [], []>} : vector<8x32xbf16>, vector<32x32xbf16>, vector<8x32xf32> -> vector<8x32xf32>
    %75 = arith.addf %38, %74 : vector<8x32xf32>
    %76 = math.tanh %75 : vector<8x32xf32>
    %77 = arith.truncf %76 : vector<8x32xf32> to vector<8x32xbf16>
    %cst_16 = arith.constant dense<0.000000e+00> : vector<8x32xf32>
    %78 = tpu.matmul %77, %2, %cst_16 {dimension_numbers = #tpu.dot_dimension_numbers<[1], [0], [0], [1], [0, 0, 1, 1], [], []>} : vector<8x32xbf16>, vector<32x32xbf16>, vector<8x32xf32> -> vector<8x32xf32>
    %79 = arith.addf %45, %78 : vector<8x32xf32>
    %80 = math.tanh %79 : vector<8x32xf32>
    %81 = arith.truncf %80 : vector<8x32xf32> to vector<8x32xbf16>
    %cst_17 = arith.constant dense<0.000000e+00> : vector<8x32xf32>
    %82 = tpu.matmul %81, %2, %cst_17 {dimension_numbers = #tpu.dot_dimension_numbers<[1], [0], [0], [1], [0, 0, 1, 1], [], []>} : vector<8x32xbf16>, vector<32x32xbf16>, vector<8x32xf32> -> vector<8x32xf32>
    %83 = arith.addf %52, %82 : vector<8x32xf32>
    %84 = math.tanh %83 : vector<8x32xf32>
    %85 = arith.truncf %84 : vector<8x32xf32> to vector<8x32xbf16>
    %cst_18 = arith.constant dense<0.000000e+00> : vector<8x32xf32>
    %86 = tpu.matmul %85, %2, %cst_18 {dimension_numbers = #tpu.dot_dimension_numbers<[1], [0], [0], [1], [0, 0, 1, 1], [], []>} : vector<8x32xbf16>, vector<32x32xbf16>, vector<8x32xf32> -> vector<8x32xf32>
    %87 = arith.addf %59, %86 : vector<8x32xf32>
    %88 = math.tanh %87 : vector<8x32xf32>
    %c0_19 = arith.constant 0 : index
    %c0_20 = arith.constant 0 : index
    %89 = vector.load %arg3[%c0_19, %c0_20] : memref<32x128xf32, #tpu.memory_space<vmem>>, vector<32x128xf32>
    %cst_21 = arith.constant dense<0.000000e+00> : vector<8x128xf32>
    %90 = tpu.matmul %88, %89, %cst_21 {dimension_numbers = #tpu.dot_dimension_numbers<[1], [0], [0], [1], [0, 0, 1, 1], [], []>} : vector<8x32xf32>, vector<32x128xf32>, vector<8x128xf32> -> vector<8x128xf32>
    %c0_22 = arith.constant 0 : index
    %c0_23 = arith.constant 0 : index
    %91 = vector.load %arg4[%c0_22, %c0_23] : memref<1x128xf32, #tpu.memory_space<vmem>>, vector<1x128xf32>
    %92 = vector.broadcast %91 : vector<1x128xf32> to vector<8x128xf32>
    %93 = arith.addf %90, %92 : vector<8x128xf32>
    %c0_24 = arith.constant 0 : index
    %c0_25 = arith.constant 0 : index
    %94 = vector.load %arg5[%c0_24, %c0_25] : memref<8x128xf32, #tpu.memory_space<vmem>>, vector<8x128xf32>
    tpu.vector_store %arg5[%c0_24, %c0_25], %93 {strides = array<i32>} : memref<8x128xf32, #tpu.memory_space<vmem>>, vector<8x128xf32>,
    return
  }
}

</mosaic_0001>

<llo_original>
// kernel: simple_rnn_forward.1
$region0: #{simple_rnn_forward.1}
  #allocation0 [shape = 'u32[]', space=smem, size = 0x4, offset = 0x4, fixed_abs, tag = 'smem constant byte address 0x4 - core index']
  #allocation1 [shape = 'u32[72,128]{1,0:T(1,128)}', space=vmem, size = 0x9000, scoped, tag = 'internal scratch']
  %s0 = inlined_call_operand.vmem [shape: s32[8,8], index: 0, kind: input, shape index: {}]
  %s1 = inlined_call_operand.vmem [shape: bf16[128,32], index: 1, kind: input, shape index: {}]
  %s2 = inlined_call_operand.vmem [shape: bf16[32,32], index: 2, kind: input, shape index: {}]
  %s3 = inlined_call_operand.vmem [shape: f32[32,128], index: 3, kind: input, shape index: {}]
  %s4 = inlined_call_operand.vmem [shape: f32[1,128], index: 4, kind: input, shape index: {}]
  %s5 = inlined_call_operand.vmem [shape: f32[8,128], index: 5, kind: output, shape index: {}]
  %s6 = sld [smem:[#allocation0]]
  $region30: #{simple_rnn_forward.1} parent=0
    _
  %s8 = ssub.s32 1, %s6
  %s9 = scalar_select 0, %s8, %s6
  // Predicated region
  $region2: #{simple_rnn_forward.1} parent=0 // pred_check
    _
  $region3: #{simple_rnn_forward.1} parent=0 // pred_check_branch
    %11 = sbr.rel (0) target = $region5
  $region4: #{simple_rnn_forward.1} parent=0 // pred_region
    _
  $region5: #{simple_rnn_forward.1} parent=0 // pred_fallthru
    _
  // Predicated region
  $region6: #{simple_rnn_forward.1} parent=0 // pred_check
    _
  $region7: #{simple_rnn_forward.1} parent=0 // pred_check_branch
    %13 = sbr.rel (0) target = $region9
  $region8: #{simple_rnn_forward.1} parent=0 // pred_region
    _
  $region9: #{simple_rnn_forward.1} parent=0 // pred_fallthru
    _
  // Predicated region
  $region10: #{simple_rnn_forward.1} parent=0 // pred_check
    _
  $region11: #{simple_rnn_forward.1} parent=0 // pred_check_branch
    %15 = sbr.rel (0) target = $region13
  $region12: #{simple_rnn_forward.1} parent=0 // pred_region
    _
  $region13: #{simple_rnn_forward.1} parent=0 // pred_fallthru
    _
  // Predicated region
  $region14: #{simple_rnn_forward.1} parent=0 // pred_check
    _
  $region15: #{simple_rnn_forward.1} parent=0 // pred_check_branch
    %17 = sbr.rel (0) target = $region17
  $region16: #{simple_rnn_forward.1} parent=0 // pred_region
    _
  $region17: #{simple_rnn_forward.1} parent=0 // pred_fallthru
    _
  // Predicated region
  $region18: #{simple_rnn_forward.1} parent=0 // pred_check
    _
  $region19: #{simple_rnn_forward.1} parent=0 // pred_check_branch
    %19 = sbr.rel (0) target = $region21
  $region20: #{simple_rnn_forward.1} parent=0 // pred_region
    _
  $region21: #{simple_rnn_forward.1} parent=0 // pred_fallthru
    _
  %v21 = vld [vmem:[%s0] sm:$0xff]
  %v22 = vld [vmem:[%s1] sm:$0xf]
  %v23 = vld [vmem:[%s1 + $0x4] sm:$0xf]
  %v24 = vld [vmem:[%s1 + $0x8] sm:$0xf]
  %v25 = vld [vmem:[%s1 + $0xc] sm:$0xf]
  %v26 = vld [vmem:[%s1 + $0x10] sm:$0xf]
  %v27 = vld [vmem:[%s1 + $0x14] sm:$0xf]
  %v28 = vld [vmem:[%s1 + $0x18] sm:$0xf]
  %v29 = vld [vmem:[%s1 + $0x1c] sm:$0xf]
  %v30 = vld [vmem:[%s1 + $0x20] sm:$0xf]
  %v31 = vld [vmem:[%s1 + $0x24] sm:$0xf]
  %v32 = vld [vmem:[%s1 + $0x28] sm:$0xf]
  %v33 = vld [vmem:[%s1 + $0x2c] sm:$0xf]
  %v34 = vld [vmem:[%s1 + $0x30] sm:$0xf]
  %v35 = vld [vmem:[%s1 + $0x34] sm:$0xf]
  %v36 = vld [vmem:[%s1 + $0x38] sm:$0xf]
  %v37 = vld [vmem:[%s1 + $0x3c] sm:$0xf]
  %v38 = vld [vmem:[%s2] sm:$0xf]
  %v39 = vld [vmem:[%s2 + $0x4] sm:$0xf]
  %v40 = vld [vmem:[%s2 + $0x8] sm:$0xf]
  %v41 = vld [vmem:[%s2 + $0xc] sm:$0xf]
  %v42 = vlaneseq
  %v43 = vand.u32 %v42, 127
  %44 = vset.pattern.permute.xlu0 0
  %45 = vperm.xlu0 %44, %v21
  %v46 = vpop.permute.xlu0 %45
  %vm47 = vcmp.eq.s32.totalorder %v43, %v46
  %v48 = vsel %vm47, 1, 0
  %v49 = vcvt.s32.f32 %v48
  %v50 = vpack.c.bf16 %v49, %v49
  %v67 = vunpack.c.l.b16 %v22
  %v68 = vunpack.c.l.b16 %v23
  %v69 = vunpack.c.l.b16 %v24
  %v70 = vunpack.c.l.b16 %v25
  %v71 = vunpack.c.l.b16 %v26
  %v72 = vunpack.c.l.b16 %v27
  %v73 = vunpack.c.l.b16 %v28
  %v74 = vunpack.c.l.b16 %v29
  %v75 = vunpack.c.l.b16 %v30
  %v76 = vunpack.c.l.b16 %v31
  %v77 = vunpack.c.l.b16 %v32
  %v78 = vunpack.c.l.b16 %v33
  %v79 = vunpack.c.l.b16 %v34
  %v80 = vunpack.c.l.b16 %v35
  %v81 = vunpack.c.l.b16 %v36
  %v82 = vunpack.c.l.b16 %v37
  %v83 = vpack.c.b16 %v68, %v67
  %v84 = vpack.c.b16 %v70, %v69
  %v85 = vpack.c.b16 %v72, %v71
  %v86 = vpack.c.b16 %v74, %v73
  %v87 = vpack.c.b16 %v76, %v75
  %v88 = vpack.c.b16 %v78, %v77
  %v89 = vpack.c.b16 %v80, %v79
  %v90 = vpack.c.b16 %v82, %v81
  %99 = vmatpush.bf16.msra.mxu0 %v90
  %100 = vmatpush.bf16.msra.mxu0 %v89
  %101 = vmatpush.bf16.msra.mxu0 %v88
  %102 = vmatpush.bf16.msra.mxu0 %v87
  %103 = vmatpush.bf16.msra.mxu0 %v86
  %104 = vmatpush.bf16.msra.mxu0 %v85
  %105 = vmatpush.bf16.msra.mxu0 %v84
  %106 = vmatpush.bf16.msra.mxu0 %v83
  %107 = vmatmul.bf16.gmra.mxu0 %v50
  %v108 = vpop.f32.mrf.mxu0
  %v109 = vadd.f32 0.0, %v108
  %v110 = vpop.f32.mrf.mxu0
  %111 = vdwg.mxu0
  %112 = vset.pattern.permute.xlu0 1
  %113 = vperm.xlu0 %112, %v21
  %v114 = vpop.permute.xlu0 %113
  %vm115 = vcmp.eq.s32.totalorder %v43, %v114
  %v116 = vsel %vm115, 1, 0
  %v117 = vcvt.s32.f32 %v116
  %v118 = vpack.c.bf16 %v117, %v117
  %119 = vset.pattern.permute.xlu0 2
  %120 = vperm.xlu0 %119, %v21
  %v121 = vpop.permute.xlu0 %120
  %vm122 = vcmp.eq.s32.totalorder %v43, %v121
  %v123 = vsel %vm122, 1, 0
  %v124 = vcvt.s32.f32 %v123
  %v125 = vpack.c.bf16 %v124, %v124
  %126 = vset.pattern.permute.xlu0 3
  %127 = vperm.xlu0 %126, %v21
  %v128 = vpop.permute.xlu0 %127
  %vm129 = vcmp.eq.s32.totalorder %v43, %v128
  %v130 = vsel %vm129, 1, 0
  %v131 = vcvt.s32.f32 %v130
  %v132 = vpack.c.bf16 %v131, %v131
  %133 = vset.pattern.permute.xlu0 4
  %134 = vperm.xlu0 %133, %v21
  %v135 = vpop.permute.xlu0 %134
  %vm136 = vcmp.eq.s32.totalorder %v43, %v135
  %v137 = vsel %vm136, 1, 0
  %v138 = vcvt.s32.f32 %v137
  %v139 = vpack.c.bf16 %v138, %v138
  %140 = vset.pattern.permute.xlu0 5
  %141 = vperm.xlu0 %140, %v21
  %v142 = vpop.permute.xlu0 %141
  %vm143 = vcmp.eq.s32.totalorder %v43, %v142
  %v144 = vsel %vm143, 1, 0
  %v145 = vcvt.s32.f32 %v144
  %v146 = vpack.c.bf16 %v145, %v145
  %147 = vset.pattern.permute.xlu0 6
  %148 = vperm.xlu0 %147, %v21
  %v149 = vpop.permute.xlu0 %148
  %vm150 = vcmp.eq.s32.totalorder %v43, %v149
  %v151 = vsel %vm150, 1, 0
  %v152 = vcvt.s32.f32 %v151
  %v153 = vpack.c.bf16 %v152, %v152
  %154 = vset.pattern.permute.xlu0 7
  %155 = vperm.xlu0 %154, %v21
  %v156 = vpop.permute.xlu0 %155
  %vm157 = vcmp.eq.s32.totalorder %v43, %v156
  %v158 = vsel %vm157, 1, 0
  %v159 = vcvt.s32.f32 %v158
  %v160 = vpack.c.bf16 %v159, %v159
  %v161 = vtanh.pop %v109
  %v162 = vpack.c.bf16 %v161, %v161
  %v167 = vunpack.c.l.b16 %v38
  %v168 = vunpack.c.l.b16 %v39
  %v169 = vunpack.c.l.b16 %v40
  %v170 = vunpack.c.l.b16 %v41
  %v171 = vpack.c.b16 %v168, %v167
  %v172 = vpack.c.b16 %v170, %v169
  %vm175 = vcmask 261120
  %v177 = vsel %vm175, %v162, 0
  %179 = vmatpush.bf16.msra.mxu0 0
  %180 = vmatpush.bf16.msra.mxu0 0
  %181 = vmatpush.bf16.msra.mxu0 0
  %182 = vmatpush.bf16.msra.mxu0 0
  %183 = vmatpush.bf16.msra.mxu0 0
  %184 = vmatpush.bf16.msra.mxu0 0
  %185 = vmatpush.bf16.msra.mxu0 %v172
  %186 = vmatpush.bf16.msra.mxu0 %v171
  %187 = vmatmul.bf16.gmra.mxu0 %v177
  %v188 = vpop.f32.mrf.mxu0
  %v189 = vadd.f32 0.0, %v188
  %v190 = vpop.f32.mrf.mxu0
  %191 = vdwg.mxu0
  %192 = vmatpush.bf16.msra.mxu0 %v90
  %193 = vmatpush.bf16.msra.mxu0 %v89
  %194 = vmatpush.bf16.msra.mxu0 %v88
  %195 = vmatpush.bf16.msra.mxu0 %v87
  %196 = vmatpush.bf16.msra.mxu0 %v86
  %197 = vmatpush.bf16.msra.mxu0 %v85
  %198 = vmatpush.bf16.msra.mxu0 %v84
  %199 = vmatpush.bf16.msra.mxu0 %v83
  %200 = vmatmul.bf16.gmra.mxu0 %v118
  %v201 = vpop.f32.mrf.mxu0
  %v202 = vadd.f32 %v189, %v201
  %v203 = vpop.f32.mrf.mxu0
  %204 = vdwg.mxu0
  %v205 = vtanh.pop %v202
  %v206 = vpack.c.bf16 %v205, %v205
  %v208 = vsel %vm175, %v206, 0
  %210 = vmatpush.bf16.msra.mxu0 0
  %211 = vmatpush.bf16.msra.mxu0 0
  %212 = vmatpush.bf16.msra.mxu0 0
  %213 = vmatpush.bf16.msra.mxu0 0
  %214 = vmatpush.bf16.msra.mxu0 0
  %215 = vmatpush.bf16.msra.mxu0 0
  %216 = vmatpush.bf16.msra.mxu0 %v172
  %217 = vmatpush.bf16.msra.mxu0 %v171
  %218 = vmatmul.bf16.gmra.mxu0 %v208
  %v219 = vpop.f32.mrf.mxu0
  %v220 = vadd.f32 0.0, %v219
  %v221 = vpop.f32.mrf.mxu0
  %222 = vdwg.mxu0
  %223 = vmatpush.bf16.msra.mxu0 %v90
  %224 = vmatpush.bf16.msra.mxu0 %v89
  %225 = vmatpush.bf16.msra.mxu0 %v88
  %226 = vmatpush.bf16.msra.mxu0 %v87
  %227 = vmatpush.bf16.msra.mxu0 %v86
  %228 = vmatpush.bf16.msra.mxu0 %v85
  %229 = vmatpush.bf16.msra.mxu0 %v84
  %230 = vmatpush.bf16.msra.mxu0 %v83
  %231 = vmatmul.bf16.gmra.mxu0 %v125
  %v232 = vpop.f32.mrf.mxu0
  %v233 = vadd.f32 %v220, %v232
  %v234 = vpop.f32.mrf.mxu0
  %235 = vdwg.mxu0
  %v236 = vtanh.pop %v233
  %v237 = vpack.c.bf16 %v236, %v236
  %v239 = vsel %vm175, %v237, 0
  %241 = vmatpush.bf16.msra.mxu0 0
  %242 = vmatpush.bf16.msra.mxu0 0
  %243 = vmatpush.bf16.msra.mxu0 0
  %244 = vmatpush.bf16.msra.mxu0 0
  %245 = vmatpush.bf16.msra.mxu0 0
  %246 = vmatpush.bf16.msra.mxu0 0
  %247 = vmatpush.bf16.msra.mxu0 %v172
  %248 = vmatpush.bf16.msra.mxu0 %v171
  %249 = vmatmul.bf16.gmra.mxu0 %v239
  %v250 = vpop.f32.mrf.mxu0
  %v251 = vadd.f32 0.0, %v250
  %v252 = vpop.f32.mrf.mxu0
  %253 = vdwg.mxu0
  %254 = vmatpush.bf16.msra.mxu0 %v90
  %255 = vmatpush.bf16.msra.mxu0 %v89
  %256 = vmatpush.bf16.msra.mxu0 %v88
  %257 = vmatpush.bf16.msra.mxu0 %v87
  %258 = vmatpush.bf16.msra.mxu0 %v86
  %259 = vmatpush.bf16.msra.mxu0 %v85
  %260 = vmatpush.bf16.msra.mxu0 %v84
  %261 = vmatpush.bf16.msra.mxu0 %v83
  %262 = vmatmul.bf16.gmra.mxu0 %v132
  %v263 = vpop.f32.mrf.mxu0
  %v264 = vadd.f32 %v251, %v263
  %v265 = vpop.f32.mrf.mxu0
  %266 = vdwg.mxu0
  %v267 = vtanh.pop %v264
  %v268 = vpack.c.bf16 %v267, %v267
  %v270 = vsel %vm175, %v268, 0
  %272 = vmatpush.bf16.msra.mxu0 0
  %273 = vmatpush.bf16.msra.mxu0 0
  %274 = vmatpush.bf16.msra.mxu0 0
  %275 = vmatpush.bf16.msra.mxu0 0
  %276 = vmatpush.bf16.msra.mxu0 0
  %277 = vmatpush.bf16.msra.mxu0 0
  %278 = vmatpush.bf16.msra.mxu0 %v172
  %279 = vmatpush.bf16.msra.mxu0 %v171
  %280 = vmatmul.bf16.gmra.mxu0 %v270
  %v281 = vpop.f32.mrf.mxu0
  %v282 = vadd.f32 0.0, %v281
  %v283 = vpop.f32.mrf.mxu0
  %284 = vdwg.mxu0
  %285 = vmatpush.bf16.msra.mxu0 %v90
  %286 = vmatpush.bf16.msra.mxu0 %v89
  %287 = vmatpush.bf16.msra.mxu0 %v88
  %288 = vmatpush.bf16.msra.mxu0 %v87
  %289 = vmatpush.bf16.msra.mxu0 %v86
  %290 = vmatpush.bf16.msra.mxu0 %v85
  %291 = vmatpush.bf16.msra.mxu0 %v84
  %292 = vmatpush.bf16.msra.mxu0 %v83
  %293 = vmatmul.bf16.gmra.mxu0 %v139
  %v294 = vpop.f32.mrf.mxu0
  %v295 = vadd.f32 %v282, %v294
  %v296 = vpop.f32.mrf.mxu0
  %297 = vdwg.mxu0
  %v298 = vtanh.pop %v295
  %v299 = vpack.c.bf16 %v298, %v298
  %v301 = vsel %vm175, %v299, 0
  %303 = vmatpush.bf16.msra.mxu0 0
  %304 = vmatpush.bf16.msra.mxu0 0
  %305 = vmatpush.bf16.msra.mxu0 0
  %306 = vmatpush.bf16.msra.mxu0 0
  %307 = vmatpush.bf16.msra.mxu0 0
  %308 = vmatpush.bf16.msra.mxu0 0
  %309 = vmatpush.bf16.msra.mxu0 %v172
  %310 = vmatpush.bf16.msra.mxu0 %v171
  %311 = vmatmul.bf16.gmra.mxu0 %v301
  %v312 = vpop.f32.mrf.mxu0
  %v313 = vadd.f32 0.0, %v312
  %v314 = vpop.f32.mrf.mxu0
  %315 = vdwg.mxu0
  %316 = vmatpush.bf16.msra.mxu0 %v90
  %317 = vmatpush.bf16.msra.mxu0 %v89
  %318 = vmatpush.bf16.msra.mxu0 %v88
  %319 = vmatpush.bf16.msra.mxu0 %v87
  %320 = vmatpush.bf16.msra.mxu0 %v86
  %321 = vmatpush.bf16.msra.mxu0 %v85
  %322 = vmatpush.bf16.msra.mxu0 %v84
  %323 = vmatpush.bf16.msra.mxu0 %v83
  %324 = vmatmul.bf16.gmra.mxu0 %v146
  %v325 = vpop.f32.mrf.mxu0
  %v326 = vadd.f32 %v313, %v325
  %v327 = vpop.f32.mrf.mxu0
  %328 = vdwg.mxu0
  %v329 = vtanh.pop %v326
  %v330 = vpack.c.bf16 %v329, %v329
  %v332 = vsel %vm175, %v330, 0
  %334 = vmatpush.bf16.msra.mxu0 0
  %335 = vmatpush.bf16.msra.mxu0 0
  %336 = vmatpush.bf16.msra.mxu0 0
  %337 = vmatpush.bf16.msra.mxu0 0
  %338 = vmatpush.bf16.msra.mxu0 0
  %339 = vmatpush.bf16.msra.mxu0 0
  %340 = vmatpush.bf16.msra.mxu0 %v172
  %341 = vmatpush.bf16.msra.mxu0 %v171
  %342 = vmatmul.bf16.gmra.mxu0 %v332
  %v343 = vpop.f32.mrf.mxu0
  %v344 = vadd.f32 0.0, %v343
  %v345 = vpop.f32.mrf.mxu0
  %346 = vdwg.mxu0
  %347 = vmatpush.bf16.msra.mxu0 %v90
  %348 = vmatpush.bf16.msra.mxu0 %v89
  %349 = vmatpush.bf16.msra.mxu0 %v88
  %350 = vmatpush.bf16.msra.mxu0 %v87
  %351 = vmatpush.bf16.msra.mxu0 %v86
  %352 = vmatpush.bf16.msra.mxu0 %v85
  %353 = vmatpush.bf16.msra.mxu0 %v84
  %354 = vmatpush.bf16.msra.mxu0 %v83
  %355 = vmatmul.bf16.gmra.mxu0 %v153
  %v356 = vpop.f32.mrf.mxu0
  %v357 = vadd.f32 %v344, %v356
  %v358 = vpop.f32.mrf.mxu0
  %359 = vdwg.mxu0
  %v360 = vtanh.pop %v357
  %v361 = vpack.c.bf16 %v360, %v360
  %v363 = vsel %vm175, %v361, 0
  %365 = vmatpush.bf16.msra.mxu0 0
  %366 = vmatpush.bf16.msra.mxu0 0
  %367 = vmatpush.bf16.msra.mxu0 0
  %368 = vmatpush.bf16.msra.mxu0 0
  %369 = vmatpush.bf16.msra.mxu0 0
  %370 = vmatpush.bf16.msra.mxu0 0
  %371 = vmatpush.bf16.msra.mxu0 %v172
  %372 = vmatpush.bf16.msra.mxu0 %v171
  %373 = vmatmul.bf16.gmra.mxu0 %v363
  %v374 = vpop.f32.mrf.mxu0
  %v375 = vadd.f32 0.0, %v374
  %v376 = vpop.f32.mrf.mxu0
  %377 = vdwg.mxu0
  %378 = vmatpush.bf16.msra.mxu0 %v90
  %379 = vmatpush.bf16.msra.mxu0 %v89
  %380 = vmatpush.bf16.msra.mxu0 %v88
  %381 = vmatpush.bf16.msra.mxu0 %v87
  %382 = vmatpush.bf16.msra.mxu0 %v86
  %383 = vmatpush.bf16.msra.mxu0 %v85
  %384 = vmatpush.bf16.msra.mxu0 %v84
  %385 = vmatpush.bf16.msra.mxu0 %v83
  %386 = vmatmul.bf16.gmra.mxu0 %v160
  %v387 = vpop.f32.mrf.mxu0
  %v388 = vadd.f32 %v375, %v387
  %v389 = vpop.f32.mrf.mxu0
  %390 = vdwg.mxu0
  %v391 = vtanh.pop %v388
  %v392 = vld [vmem:[%s3] sm:$0xff]
  %v393 = vld [vmem:[%s3 + $0x8] sm:$0xff]
  %v394 = vld [vmem:[%s3 + $0x10] sm:$0xff]
  %v395 = vld [vmem:[%s3 + $0x18] sm:$0xff]
  %v396 = vld [vmem:[%s4] sm:$0x1]
  %v398 = vperm.slane %v396, 0
  %v401 = vsel %vm175, %v391, 0
  %403 = vmatpush.msra.mxu0 0.0
  %404 = vmatpush.msra.mxu0 0.0
  %405 = vmatpush.msra.mxu0 0.0
  %406 = vmatpush.msra.mxu0 0.0
  %407 = vmatpush.msra.mxu0 0.0
  %408 = vmatpush.msra.mxu0 0.0
  %409 = vmatpush.msra.mxu0 0.0
  %410 = vmatpush.msra.mxu0 0.0
  %411 = vmatpush.msra.mxu0 0.0
  %412 = vmatpush.msra.mxu0 0.0
  %413 = vmatpush.msra.mxu0 0.0
  %414 = vmatpush.msra.mxu0 0.0
  %415 = vmatpush.msra.mxu0 %v395
  %416 = vmatpush.msra.mxu0 %v394
  %417 = vmatpush.msra.mxu0 %v393
  %418 = vmatpush.msra.mxu0 %v392
  %419 = vmatmul.f32.gmra.mxu0 %v401
  %v420 = vpop.f32.mrf.mxu0
  %v421 = vadd.f32 %v398, %v420
  %422 = vdwg.mxu0
  %423 = vst [vmem:[%s5] sm:$0xff] %v421
  // Predicated region
  $region22: #{simple_rnn_forward.1} parent=0 // pred_check
    _
  $region23: #{simple_rnn_forward.1} parent=0 // pred_check_branch
    %425 = sbr.rel (0) target = $region25
  $region24: #{simple_rnn_forward.1} parent=0 // pred_region
    _
  $region25: #{simple_rnn_forward.1} parent=0 // pred_fallthru
    _
  // Predicated region
  $region26: #{simple_rnn_forward.1} parent=0 // pred_check
    _
  $region27: #{simple_rnn_forward.1} parent=0 // pred_check_branch
    %427 = sbr.rel (0) target = $region29
  $region28: #{simple_rnn_forward.1} parent=0 // pred_region
    _
  $region29: #{simple_rnn_forward.1} parent=0 // pred_fallthru
    _

</llo_original>
